<compile_context>
chip_gen: v7x
topology: tpu7x:2x2x1
jax: 0.10.0
libtpu: 0.0.40
codegen_flags: <defaults>
</compile_context>

<pallas_src>
import functools

import jax
import jax.numpy as jnp
from jax import lax
from jax.experimental import pallas as pl
from jax.experimental.pallas import tpu as pltpu

LANES = 128
ACC_ROWS = 64        # resident accumulator rows (8 f32 vregs) -> 8 independent add chains
CHUNK_ROWS = 1024    # rows per in-kernel chunk (bounds live VMEM temporaries to ~2-3 MiB)
ROW_TILE = 8192      # rows per grid step: 4 MiB (f32) / 2 MiB (bf16) per input per step


def _cdiv(a, b):
    return -(-a // b)


def _round_up(x, m):
    return _cdiv(x, m) * m


def _num_core_splits():
    # Only multi-TensorCore v7x benefits from splitting the reduction across a
    # leading grid axis; on single-TC v5e/v6e it is just a serial loop with a
    # possible duplicated (masked) tile, so keep it at 1 there.
    # TODO(synk): if a v7x profile shows both halves landing on one TensorCore,
    # switch the leading axis to pltpu.CORE_PARALLEL (or pl.core_map over a
    # 2-core mesh) instead of the "parallel" string semantics.
    try:
        kind = jax.devices()[0].device_kind.lower()
    except Exception:
        return 1
    return 2 if ("v7" in kind or "tpu7" in kind) else 1


def _masked_sse_kernel(pred_ref, tgt_ref, out_ref, *,
                       block_rows, chunk_rows, tiles_per_core, num_tiles,
                       last_valid_rows, has_partial, has_duplicate):
    """Accumulate sum((target - pred)^2 where target != -1) into a lane-shaped
    (ACC_ROWS, 128) f32 block that stays resident across the reduction axis."""
    c = pl.program_id(0)   # core-split axis ('parallel'; size 1 on v5e/v6e)
    i = pl.program_id(1)   # row-tile within this core's range ('arbitrary')

    @pl.when(i == 0)
    def _():
        out_ref[...] = jnp.zeros_like(out_ref)

    tile_idx = c * tiles_per_core + i

    def accumulate(masked, n_chunks):
        def body(j, acc):
            r0 = pl.multiple_of(j * chunk_rows, chunk_rows)
            p = pred_ref[pl.ds(r0, chunk_rows), :].astype(jnp.float32)
            t = tgt_ref[pl.ds(r0, chunk_rows), :].astype(jnp.float32)
            valid = t != jnp.float32(-1.0)
            if masked:
                # Only the single partial last tile ever pays for this row mask.
                row = lax.broadcasted_iota(jnp.int32, (chunk_rows, LANES), 0) + r0
                valid = jnp.logical_and(valid, row < last_valid_rows)
            diff = t - p
            sq = jnp.where(valid, diff * diff, jnp.float32(0.0))
            # (chunk, 128) -> (chunk/ACC_ROWS, ACC_ROWS, 128): summing axis 0
            # gives 8 independent vreg add-chains instead of one long serial
            # dependent chain (v7x latency concern).
            part = sq.reshape(chunk_rows // ACC_ROWS, ACC_ROWS, LANES).sum(axis=0)
            return acc + part

        acc = lax.fori_loop(0, n_chunks, body,
                            jnp.zeros((ACC_ROWS, LANES), jnp.float32))
        out_ref[...] += acc

    full_chunks = block_rows // chunk_rows

    if has_partial:
        @pl.when(tile_idx == num_tiles - 1)
        def _():
            accumulate(masked=True, n_chunks=_cdiv(last_valid_rows, chunk_rows))
        rest_cond = tile_idx < num_tiles - 1
    else:
        rest_cond = tile_idx < num_tiles

    if has_partial or has_duplicate:
        @pl.when(rest_cond)
        def _():
            accumulate(masked=False, n_chunks=full_chunks)
    else:
        # Hot path: no per-element bounds mask, no branching at all.
        accumulate(masked=False, n_chunks=full_chunks)


def _pallas_sse(pred2d, tgt2d, block_rows, chunk_rows, num_splits):
    rows_arr = pred2d.shape[0]
    num_tiles = _cdiv(rows_arr, block_rows)
    tiles_per_core = _cdiv(num_tiles, num_splits)
    last_valid_rows = rows_arr - (num_tiles - 1) * block_rows
    has_partial = last_valid_rows < block_rows
    has_duplicate = num_splits * tiles_per_core > num_tiles

    kernel = functools.partial(
        _masked_sse_kernel,
        block_rows=block_rows, chunk_rows=chunk_rows,
        tiles_per_core=tiles_per_core, num_tiles=num_tiles,
        last_valid_rows=last_valid_rows,
        has_partial=has_partial, has_duplicate=has_duplicate)

    def in_map(c, i):
        # Clamp so a duplicate tile (odd split across cores) re-reads the last
        # real tile instead of going out of bounds; the kernel skips it via a
        # scalar pl.when, so nothing is double-counted.
        t = c * tiles_per_core + i
        return (jnp.minimum(t, num_tiles - 1), 0)

    # 2 inputs x 2 pipeline buffers x block + chunk-sized temporaries + slack.
    block_bytes = block_rows * LANES * max(pred2d.dtype.itemsize,
                                           tgt2d.dtype.itemsize)
    vmem_limit = int(4 * block_bytes + (24 << 20))   # <= ~40 MiB (f32, 8192 rows)

    partials = pl.pallas_call(
        kernel,
        out_shape=jax.ShapeDtypeStruct((num_splits * ACC_ROWS, LANES), jnp.float32),
        grid_spec=pltpu.PrefetchScalarGridSpec(
            num_scalar_prefetch=0,
            grid=(num_splits, tiles_per_core),
            in_specs=[
                pl.BlockSpec((block_rows, LANES), in_map),
                pl.BlockSpec((block_rows, LANES), in_map),
            ],
            out_specs=pl.BlockSpec((ACC_ROWS, LANES), lambda c, i: (c, 0)),
        ),
        compiler_params=pltpu.CompilerParams(
            dimension_semantics=("parallel", "arbitrary"),
            vmem_limit_bytes=vmem_limit,
        ),
    )(pred2d, tgt2d)
    # Single cross-lane/sublane reduce, outside the kernel.
    return jnp.sum(partials)


@functools.partial(jax.jit, static_argnames=("reduction",))
def loss_function(pred, target, reduction="sum"):
    assert pred.shape == target.shape, (
        "Prediction and target should have the same shape")
    batch_size = target.shape[0]

    # Keep f32/bf16 in their storage dtype (upcast happens in-kernel); promote
    # anything else to f32.
    def _prep(x):
        if x.dtype != jnp.float32 and x.dtype != jnp.bfloat16:
            x = x.astype(jnp.float32)
        return jnp.ravel(x)

    pred_flat = _prep(pred)
    tgt_flat = _prep(target)
    n = pred_flat.shape[0]

    num_splits = _num_core_splits()

    rows = n // LANES
    n_main = rows * LANES

    # Sub-128-element tail handled with plain jnp (fuses with its slice).
    if n_main < n:
        p_tail = pred_flat[n_main:].astype(jnp.float32)
        t_tail = tgt_flat[n_main:].astype(jnp.float32)
        tail_sum = jnp.sum(
            jnp.where(t_tail != jnp.float32(-1.0), (t_tail - p_tail) ** 2,
                      jnp.float32(0.0)))
    else:
        tail_sum = jnp.float32(0.0)

    if rows == 0:
        loss_sum = tail_sum
    else:
        if n_main < n:
            # TODO(synk): this prefix slice still copies pred/target once when
            # n % 128 != 0; a fully copy-free tail needs 1-D blocks / manual DMA.
            pred_main = lax.slice(pred_flat, (0,), (n_main,))
            tgt_main = lax.slice(tgt_flat, (0,), (n_main,))
        else:
            pred_main, tgt_main = pred_flat, tgt_flat

        if rows >= ROW_TILE:
            # Large path: stream fixed (ROW_TILE, 128) blocks straight out of the
            # original buffers (no pad copy); the final partial tile is masked
            # in-kernel behind a scalar pl.when.
            block_rows = ROW_TILE
            chunk_rows = CHUNK_ROWS
            pred2d = pred_main.reshape(rows, LANES)
            tgt2d = tgt_main.reshape(rows, LANES)
        else:
            # Small path: one block == whole (padded) array; padded target rows
            # are -1 so they contribute nothing, and the core split is forced to
            # 1 so there is never a duplicate tile / wasted DMA.
            num_splits = 1
            pad_to = ACC_ROWS if rows <= CHUNK_ROWS else CHUNK_ROWS
            padded_rows = _round_up(rows, pad_to)
            block_rows = padded_rows
            chunk_rows = min(CHUNK_ROWS, padded_rows)
            pad = padded_rows * LANES - n_main
            pred2d = jnp.pad(pred_main, (0, pad)).reshape(padded_rows, LANES)
            tgt2d = jnp.pad(tgt_main, (0, pad),
                            constant_values=-1.0).reshape(padded_rows, LANES)

        loss_sum = _pallas_sse(pred2d, tgt2d, block_rows, chunk_rows,
                               num_splits) + tail_sum

    if reduction == "sum":
        return loss_sum
    return loss_sum / jnp.float32(batch_size)


def _reference(pred, target, reduction="sum"):
    p = jnp.ravel(pred).astype(jnp.float32)
    t = jnp.ravel(target).astype(jnp.float32)
    sq = jnp.where(t != -1.0, (t - p) ** 2, 0.0)
    s = jnp.sum(sq)
    return s if reduction == "sum" else s / target.shape[0]


if __name__ == "__main__":
    key = jax.random.PRNGKey(0)
    k1, k2, k3, k4, k5, k6 = jax.random.split(key, 6)

    # Small-shape check (typical module inputs); exercises the small path.
    shape = (2, 4, 16, 16)
    pred = jax.random.normal(k1, shape, dtype=jnp.float32)
    target = jax.random.normal(k2, shape, dtype=jnp.float32)
    ignore = jax.random.bernoulli(k3, p=0.2, shape=shape)
    target = jnp.where(ignore, jnp.float32(-1.0), target)

    out_sum = jax.block_until_ready(loss_function(pred, target, reduction="sum"))
    out_mean = jax.block_until_ready(loss_function(pred, target, reduction="mean"))
    ref_sum = _reference(pred, target, "sum")
    ref_mean = _reference(pred, target, "mean")
    assert jnp.allclose(out_sum, ref_sum, rtol=1e-5, atol=1e-5), (out_sum, ref_sum)
    assert jnp.allclose(out_mean, ref_mean, rtol=1e-5, atol=1e-5), (out_mean, ref_mean)

    # Medium check exercising the streaming path: multiple (8192,128) tiles,
    # a masked partial last tile, and a sub-128-element tail.
    shape2 = (2, 524499)   # n = 1,048,998 = 8195*128 + 38
    pred2 = jax.random.normal(k4, shape2, dtype=jnp.float32)
    target2 = jax.random.normal(k5, shape2, dtype=jnp.float32)
    ignore2 = jax.random.bernoulli(k6, p=0.2, shape=shape2)
    target2 = jnp.where(ignore2, jnp.float32(-1.0), target2)

    out2 = jax.block_until_ready(loss_function(pred2, target2, reduction="sum"))
    ref2 = _reference(pred2, target2, "sum")
    assert jnp.allclose(out2, ref2, rtol=5e-5, atol=1e-2), (out2, ref2)

    print("KERNEL_OK")
</pallas_src>

<mosaic_0001>
module attributes {stable_mosaic.version = 11 : i64} {
  func.func @_masked_sse_kernel(%arg0: i32, %arg1: i32, %arg2: memref<64x128xf32, #tpu.memory_space<vmem>>, %arg3: memref<64x128xf32, #tpu.memory_space<vmem>>, %arg4: memref<64x128xf32, #tpu.memory_space<vmem>>) attributes {dimension_semantics = [#tpu.dimension_semantics<parallel>, #tpu.dimension_semantics<arbitrary>], iteration_bounds = array<i64: 1, 1>, scalar_prefetch = 0 : i64, scratch_operands = 0 : i64, tpu.core_type = #tpu.core_type<tc>, window_params = [{transform_indices = @transform_0, window_bounds = array<i64: 64, 128>}, {transform_indices = @transform_1, window_bounds = array<i64: 64, 128>}, {transform_indices = @transform_2, window_bounds = array<i64: 64, 128>}]} {
    %c0_i32 = arith.constant 0 : i32
    %0 = arith.cmpi eq, %arg1, %c0_i32 : i32
    %1 = arith.extui %0 : i1 to i32
    %c0_i32_0 = arith.constant 0 : i32
    %2 = arith.cmpi ne, %1, %c0_i32_0 : i32
    scf.if %2 {
      %cst_10 = arith.constant 0.000000e+00 : f32
      %22 = vector.broadcast %cst_10 : f32 to vector<64x128xf32>
      %c0_11 = arith.constant 0 : index
      %c0_12 = arith.constant 0 : index
      %23 = vector.load %arg4[%c0_11, %c0_12] : memref<64x128xf32, #tpu.memory_space<vmem>>, vector<64x128xf32>
      tpu.vector_store %arg4[%c0_11, %c0_12], %22 {strides = array<i32>} : memref<64x128xf32, #tpu.memory_space<vmem>>, vector<64x128xf32>,
    } else {
    }
    %cst = arith.constant 0.000000e+00 : f32
    %3 = vector.broadcast %cst : f32 to vector<64x128xf32>
    %c0_i32_1 = arith.constant 0 : i32
    %c64_i32 = arith.constant 64 : i32
    %4 = arith.muli %c0_i32_1, %c64_i32 : i32
    %5 = tpu.assume_multiple %4, 64 : i32
    %6 = arith.index_cast %5 : i32 to index
    %c0 = arith.constant 0 : index
    %7 = vector.load %arg2[%6, %c0] : memref<64x128xf32, #tpu.memory_space<vmem>>, vector<64x128xf32>
    %8 = arith.index_cast %5 : i32 to index
    %c0_2 = arith.constant 0 : index
    %9 = vector.load %arg3[%8, %c0_2] : memref<64x128xf32, #tpu.memory_space<vmem>>, vector<64x128xf32>
    %cst_3 = arith.constant -1.000000e+00 : f32
    %10 = vector.broadcast %cst_3 : f32 to vector<64x128xf32>
    %11 = arith.cmpf one, %9, %10 : vector<64x128xf32>
    %12 = arith.subf %9, %7 : vector<64x128xf32>
    %13 = arith.mulf %12, %12 : vector<64x128xf32>
    %cst_4 = arith.constant 0.000000e+00 : f32
    %14 = vector.broadcast %cst_4 : f32 to vector<64x128xf32>
    %15 = arith.select %11, %13, %14 : vector<64x128xi1>, vector<64x128xf32>
    %16 = vector.shape_cast %15 : vector<64x128xf32> to vector<1x64x128xf32>
    %cst_5 = arith.constant dense<0.000000e+00> : vector<64x128xf32>
    %17 = vector.multi_reduction <add>, %16, %cst_5 [0] : vector<1x64x128xf32> to vector<64x128xf32>
    %18 = arith.addf %3, %17 : vector<64x128xf32>
    %c1_i32 = arith.constant 1 : i32
    %c0_6 = arith.constant 0 : index
    %c0_7 = arith.constant 0 : index
    %19 = vector.load %arg4[%c0_6, %c0_7] : memref<64x128xf32, #tpu.memory_space<vmem>>, vector<64x128xf32>
    %20 = arith.addf %19, %18 : vector<64x128xf32>
    %c0_8 = arith.constant 0 : index
    %c0_9 = arith.constant 0 : index
    %21 = vector.load %arg4[%c0_8, %c0_9] : memref<64x128xf32, #tpu.memory_space<vmem>>, vector<64x128xf32>
    tpu.vector_store %arg4[%c0_8, %c0_9], %20 {strides = array<i32>} : memref<64x128xf32, #tpu.memory_space<vmem>>, vector<64x128xf32>,
    return
  }
  func.func @transform_0(%arg0: i32, %arg1: i32) -> (i32, i32) {
    %c1_i32 = arith.constant 1 : i32
    %0 = arith.muli %arg0, %c1_i32 : i32
    %1 = arith.addi %0, %arg1 : i32
    %c0_i32 = arith.constant 0 : i32
    %2 = arith.minsi %1, %c0_i32 : i32
    %c0_i32_0 = arith.constant 0 : i32
    %c0_i32_1 = arith.constant 0 : i32
    return %2, %c0_i32_0 : i32, i32
  }
  func.func @transform_1(%arg0: i32, %arg1: i32) -> (i32, i32) {
    %c1_i32 = arith.constant 1 : i32
    %0 = arith.muli %arg0, %c1_i32 : i32
    %1 = arith.addi %0, %arg1 : i32
    %c0_i32 = arith.constant 0 : i32
    %2 = arith.minsi %1, %c0_i32 : i32
    %c0_i32_0 = arith.constant 0 : i32
    %c0_i32_1 = arith.constant 0 : i32
    return %2, %c0_i32_0 : i32, i32
  }
  func.func @transform_2(%arg0: i32, %arg1: i32) -> (i32, i32) {
    %c0_i32 = arith.constant 0 : i32
    %c0_i32_0 = arith.constant 0 : i32
    return %arg0, %c0_i32 : i32, i32
  }
}

</mosaic_0001>

<llo_original>
// kernel: loss_function.1
$region0: #{loss_function.1}
  #allocation0 [shape = 'u32[]', space=smem, size = 0x4, offset = 0x4, fixed_abs, tag = 'smem constant byte address 0x4 - core index']
  #allocation1 [shape = 'u32[144,128]{1,0:T(1,128)}', space=vmem, size = 0x12000, scoped, tag = 'internal scratch']
  %s0 = inlined_call_operand.vmem [shape: f32[64,128], index: 0, kind: input, shape index: {}]
  %s1 = inlined_call_operand.vmem [shape: f32[64,128], index: 1, kind: input, shape index: {}]
  %s2 = inlined_call_operand.vmem [shape: f32[64,128], index: 2, kind: output, shape index: {}]
  %s3 = sld [smem:[#allocation0]]
  $region22: #{loss_function.1} parent=0
    _
  %s5 = ssub.s32 1, %s3
  %s6 = scalar_select 0, %s5, %s3
  // Predicated region
  $region2: #{loss_function.1} parent=0 // pred_check
    _
  $region3: #{loss_function.1} parent=0 // pred_check_branch
    %8 = sbr.rel (0) target = $region5
  $region4: #{loss_function.1} parent=0 // pred_region
    %s9 = sadd.s32 0, 0
    %p10 = scmp.lt.s32.totalorder %s9, 0
    %s11 = scalar_select %p10, %s9, 0
    %s12 = smul.u32 8, %s11
    %p13 = scmp.lt.s32.totalorder %s12, 7
    %s14 = scalar_select %p13, %s12, 7
    %s15 = smul.addr %s14, 8
    %s16 = scalar_lea.vmem %s0, %s15
    %s17 = sadd.s32 0, 0
    %p18 = scmp.lt.s32.totalorder %s17, 0
    %s19 = scalar_select %p18, %s17, 0
    %s20 = smul.u32 8, %s19
  $region5: #{loss_function.1} parent=0 // pred_fallthru
    _
  // Predicated region
  $region6: #{loss_function.1} parent=0 // pred_check
    _
  $region7: #{loss_function.1} parent=0 // pred_check_branch
    %22 = sbr.rel (0) target = $region9
  $region8: #{loss_function.1} parent=0 // pred_region
    %s23 = sadd.s32 0, 0
    %p24 = scmp.lt.s32.totalorder %s23, 0
    %s25 = scalar_select %p24, %s23, 0
    %s26 = smul.u32 8, %s25
    %p27 = scmp.lt.s32.totalorder %s26, 7
    %s28 = scalar_select %p27, %s26, 7
    %s29 = smul.addr %s28, 8
    %s30 = scalar_lea.vmem %s1, %s29
    %s31 = sadd.s32 0, 0
    %p32 = scmp.lt.s32.totalorder %s31, 0
    %s33 = scalar_select %p32, %s31, 0
    %s34 = smul.u32 8, %s33
  $region9: #{loss_function.1} parent=0 // pred_fallthru
    _
  %s35 = sadd.s32 0, 0
  %p36 = scmp.lt.s32.totalorder %s35, 0
  %s37 = scalar_select %p36, %s35, 0
  %s38 = smul.u32 8, %s37
  %p39 = scmp.lt.s32.totalorder %s38, 7
  %s40 = scalar_select %p39, %s38, 7
  %s41 = smul.addr %s40, 8
  %s42 = scalar_lea.vmem %s0, %s41
  %s43 = sadd.s32 0, 0
  %p44 = scmp.lt.s32.totalorder %s43, 0
  %s45 = scalar_select %p44, %s43, 0
  %s46 = smul.u32 8, %s45
  %p47 = scmp.lt.s32.totalorder %s46, 7
  %s48 = scalar_select %p47, %s46, 7
  %s49 = smul.addr %s48, 8
  %s50 = scalar_lea.vmem %s1, %s49
  %s51 = sadd.s32 0, 0
  %p52 = scmp.lt.s32.totalorder %s51, 0
  %s53 = scalar_select %p52, %s51, 0
  %s54 = smul.u32 8, %s53
  %p55 = scmp.lt.s32.totalorder %s54, 7
  %s56 = scalar_select %p55, %s54, 7
  %s57 = smul.addr %s56, 8
  %s58 = scalar_lea.vmem %s0, %s57
  %s59 = sadd.s32 0, 0
  %p60 = scmp.lt.s32.totalorder %s59, 0
  %s61 = scalar_select %p60, %s59, 0
  %s62 = smul.u32 8, %s61
  %s63 = sadd.s32 0, 0
  %p64 = scmp.lt.s32.totalorder %s63, 0
  %s65 = scalar_select %p64, %s63, 0
  %s66 = smul.u32 8, %s65
  %p67 = scmp.lt.s32.totalorder %s66, 7
  %s68 = scalar_select %p67, %s66, 7
  %s69 = smul.addr %s68, 8
  %s70 = scalar_lea.vmem %s1, %s69
  %s71 = sadd.s32 0, 0
  %p72 = scmp.lt.s32.totalorder %s71, 0
  %s73 = scalar_select %p72, %s71, 0
  %s74 = smul.u32 8, %s73
  %p75 = scmp.eq.s32.totalorder 0, 0
  // Predicated region
  $region10: #{loss_function.1} parent=0 // pred_check
    %p76 = pneg %p75
  $region11: #{loss_function.1} parent=0 // pred_check_branch
    %78 = sbr.rel (%p76) target = $region13
  $region12: #{loss_function.1} parent=0 // pred_region
    %79 = vst [vmem:[%s2] sm:$0xff] 0.0
    %80 = vst [vmem:[%s2 + $0x8] sm:$0xff] 0.0
    %81 = vst [vmem:[%s2 + $0x10] sm:$0xff] 0.0
    %82 = vst [vmem:[%s2 + $0x18] sm:$0xff] 0.0
    %83 = vst [vmem:[%s2 + $0x20] sm:$0xff] 0.0
    %84 = vst [vmem:[%s2 + $0x28] sm:$0xff] 0.0
    %85 = vst [vmem:[%s2 + $0x30] sm:$0xff] 0.0
    %86 = vst [vmem:[%s2 + $0x38] sm:$0xff] 0.0
  $region13: #{loss_function.1} parent=0 // pred_fallthru
    _
  %v87 = vld [vmem:[%s58] sm:$0xff]
  %v88 = vld [vmem:[%s58 + $0x8] sm:$0xff]
  %v89 = vld [vmem:[%s58 + $0x10] sm:$0xff]
  %v90 = vld [vmem:[%s58 + $0x18] sm:$0xff]
  %v91 = vld [vmem:[%s58 + $0x20] sm:$0xff]
  %v92 = vld [vmem:[%s58 + $0x28] sm:$0xff]
  %v93 = vld [vmem:[%s58 + $0x30] sm:$0xff]
  %v94 = vld [vmem:[%s58 + $0x38] sm:$0xff]
  %v95 = vld [vmem:[%s70] sm:$0xff]
  %v96 = vld [vmem:[%s70 + $0x8] sm:$0xff]
  %v97 = vld [vmem:[%s70 + $0x10] sm:$0xff]
  %v98 = vld [vmem:[%s70 + $0x18] sm:$0xff]
  %v99 = vld [vmem:[%s70 + $0x20] sm:$0xff]
  %v100 = vld [vmem:[%s70 + $0x28] sm:$0xff]
  %v101 = vld [vmem:[%s70 + $0x30] sm:$0xff]
  %v102 = vld [vmem:[%s70 + $0x38] sm:$0xff]
  %vm103 = vcmp.ne.f32.partialorder %v95, -1.0
  %vm104 = vcmp.ne.f32.partialorder %v96, -1.0
  %vm105 = vcmp.ne.f32.partialorder %v97, -1.0
  %vm106 = vcmp.ne.f32.partialorder %v98, -1.0
  %vm107 = vcmp.ne.f32.partialorder %v99, -1.0
  %vm108 = vcmp.ne.f32.partialorder %v100, -1.0
  %vm109 = vcmp.ne.f32.partialorder %v101, -1.0
  %vm110 = vcmp.ne.f32.partialorder %v102, -1.0
  %v111 = vsub.f32 %v95, %v87
  %v112 = vsub.f32 %v96, %v88
  %v113 = vsub.f32 %v97, %v89
  %v114 = vsub.f32 %v98, %v90
  %v115 = vsub.f32 %v99, %v91
  %v116 = vsub.f32 %v100, %v92
  %v117 = vsub.f32 %v101, %v93
  %v118 = vsub.f32 %v102, %v94
  %v119 = vmul.f32 %v111, %v111
  %v120 = vmul.f32 %v112, %v112
  %v121 = vmul.f32 %v113, %v113
  %v122 = vmul.f32 %v114, %v114
  %v123 = vmul.f32 %v115, %v115
  %v124 = vmul.f32 %v116, %v116
  %v125 = vmul.f32 %v117, %v117
  %v126 = vmul.f32 %v118, %v118
  %v127 = vsel %vm103, %v119, 0.0
  %v128 = vsel %vm104, %v120, 0.0
  %v129 = vsel %vm105, %v121, 0.0
  %v130 = vsel %vm106, %v122, 0.0
  %v131 = vsel %vm107, %v123, 0.0
  %v132 = vsel %vm108, %v124, 0.0
  %v133 = vsel %vm109, %v125, 0.0
  %v134 = vsel %vm110, %v126, 0.0
  %v135 = vadd.f32 %v127, 0.0
  %v136 = vadd.f32 %v128, 0.0
  %v137 = vadd.f32 %v129, 0.0
  %v138 = vadd.f32 %v130, 0.0
  %v139 = vadd.f32 %v131, 0.0
  %v140 = vadd.f32 %v132, 0.0
  %v141 = vadd.f32 %v133, 0.0
  %v142 = vadd.f32 %v134, 0.0
  %v143 = vadd.f32 %v135, 0.0
  %v144 = vadd.f32 %v136, 0.0
  %v145 = vadd.f32 %v137, 0.0
  %v146 = vadd.f32 %v138, 0.0
  %v147 = vadd.f32 %v139, 0.0
  %v148 = vadd.f32 %v140, 0.0
  %v149 = vadd.f32 %v141, 0.0
  %v150 = vadd.f32 %v142, 0.0
  %v151 = vld [vmem:[%s2] sm:$0xff]
  %v152 = vld [vmem:[%s2 + $0x8] sm:$0xff]
  %v153 = vld [vmem:[%s2 + $0x10] sm:$0xff]
  %v154 = vld [vmem:[%s2 + $0x18] sm:$0xff]
  %v155 = vld [vmem:[%s2 + $0x20] sm:$0xff]
  %v156 = vld [vmem:[%s2 + $0x28] sm:$0xff]
  %v157 = vld [vmem:[%s2 + $0x30] sm:$0xff]
  %v158 = vld [vmem:[%s2 + $0x38] sm:$0xff]
  %v159 = vadd.f32 %v151, %v143
  %v160 = vadd.f32 %v152, %v144
  %v161 = vadd.f32 %v153, %v145
  %v162 = vadd.f32 %v154, %v146
  %v163 = vadd.f32 %v155, %v147
  %v164 = vadd.f32 %v156, %v148
  %v165 = vadd.f32 %v157, %v149
  %v166 = vadd.f32 %v158, %v150
  %167 = vst [vmem:[%s2] sm:$0xff] %v159
  %168 = vst [vmem:[%s2 + $0x8] sm:$0xff] %v160
  %169 = vst [vmem:[%s2 + $0x10] sm:$0xff] %v161
  %170 = vst [vmem:[%s2 + $0x18] sm:$0xff] %v162
  %171 = vst [vmem:[%s2 + $0x20] sm:$0xff] %v163
  %172 = vst [vmem:[%s2 + $0x28] sm:$0xff] %v164
  %173 = vst [vmem:[%s2 + $0x30] sm:$0xff] %v165
  %174 = vst [vmem:[%s2 + $0x38] sm:$0xff] %v166
  // Predicated region
  $region14: #{loss_function.1} parent=0 // pred_check
    _
  $region15: #{loss_function.1} parent=0 // pred_check_branch
    %176 = sbr.rel (0) target = $region17
  $region16: #{loss_function.1} parent=0 // pred_region
    _
  $region17: #{loss_function.1} parent=0 // pred_fallthru
    _
  // Predicated region
  $region18: #{loss_function.1} parent=0 // pred_check
    _
  $region19: #{loss_function.1} parent=0 // pred_check_branch
    %178 = sbr.rel (0) target = $region21
  $region20: #{loss_function.1} parent=0 // pred_region
    _
  $region21: #{loss_function.1} parent=0 // pred_fallthru
    _

</llo_original>
